<compile_context>
chip_gen: v7x
topology: tpu7x:2x2x1
jax: 0.10.0
libtpu: 0.0.40
codegen_flags: <defaults>
</compile_context>

<pallas_src>
import jax
import jax.numpy as jnp
from jax.experimental import pallas as pl
from jax.experimental.pallas import tpu as pltpu


def _round_up(n, m):
    return ((n + m - 1) // m) * m


def mlp_kernel(x_ref, w1_ref, b1_ref, w2_ref, b2_ref, out_ref):
    """One grid step == one (TM, C) row tile of the flattened token matrix."""
    x = x_ref[...]                                            # (TM, C) bf16

    # fc1: (TM, C) @ (C, H) -> (TM, H), f32 accumulation, f32 bias add.
    h = jnp.dot(x, w1_ref[...], preferred_element_type=jnp.float32)
    h = h + b1_ref[...]

    # Exact (erf-based) GELU in f32, matching torch.nn.GELU() default.
    h = 0.5 * h * (1.0 + jax.lax.erf(h * 0.7071067811865476))

    # Dropout p=0.0 -> identity (no-op).

    # fc2: bf16 operands, f32 accumulation, f32 bias add.
    y = jnp.dot(h.astype(w2_ref.dtype), w2_ref[...],
                preferred_element_type=jnp.float32)
    out_ref[...] = (y + b2_ref[...]).astype(out_ref.dtype)


def mlp_forward(x, w1, b1, w2, b2, *, block_rows=256):
    """x: (B, N, C).  Torch layouts: w1 (H, C), b1 (H,), w2 (C_out, H), b2 (C_out,)."""
    assert block_rows % 8 == 0
    B, N, C = x.shape
    H = w1.shape[0]
    C_out = w2.shape[0]

    # Flatten tokens and pad rows so every tile is full and sublane-dense.
    M = B * N
    tm = min(block_rows, _round_up(M, 8))
    M_pad = _round_up(M, tm)
    x_flat = x.reshape(M, C)
    if M_pad != M:
        x_flat = jnp.pad(x_flat, ((0, M_pad - M), (0, 0)))

    # bf16 matmul operands (MXU-native), f32 biases.
    x_bf = x_flat.astype(jnp.bfloat16)
    w1_t = w1.T.astype(jnp.bfloat16)                 # (C, H)
    w2_t = w2.T.astype(jnp.bfloat16)                 # (H, C_out)
    b1_2d = b1.reshape(1, H).astype(jnp.float32)
    b2_2d = b2.reshape(1, C_out).astype(jnp.float32)

    grid = (M_pad // tm,)

    out_flat = pl.pallas_call(
        mlp_kernel,
        out_shape=jax.ShapeDtypeStruct((M_pad, C_out), jnp.float32),
        grid_spec=pltpu.PrefetchScalarGridSpec(
            num_scalar_prefetch=0,
            grid=grid,
            in_specs=[
                pl.BlockSpec((tm, C), lambda i: (i, 0)),       # x row tile
                pl.BlockSpec((C, H), lambda i: (0, 0)),        # fc1 weight (resident)
                pl.BlockSpec((1, H), lambda i: (0, 0)),        # fc1 bias   (resident)
                pl.BlockSpec((H, C_out), lambda i: (0, 0)),    # fc2 weight (resident)
                pl.BlockSpec((1, C_out), lambda i: (0, 0)),    # fc2 bias   (resident)
            ],
            out_specs=pl.BlockSpec((tm, C_out), lambda i: (i, 0)),
        ),
        compiler_params=pltpu.CompilerParams(
            dimension_semantics=("parallel",)),                # shard tiles across TCs (v7x)
    )(x_bf, w1_t, b1_2d, w2_t, b2_2d)

    return out_flat[:M].reshape(B, N, C_out)


def reference_forward(x, w1, b1, w2, b2):
    """Plain-JAX f32 replica of the PyTorch Mlp forward for verification."""
    h = x @ w1.T + b1
    h = 0.5 * h * (1.0 + jax.lax.erf(h * 0.7071067811865476))   # exact GELU
    return h @ w2.T + b2


if __name__ == "__main__":
    # Small module-consistent shapes: dim=32, mlp_ratio=4 -> hidden=128,
    # 16 tokens, batch=2.
    B, N, C, H = 2, 16, 32, 128

    key = jax.random.PRNGKey(0)
    kx, k1, kb1, k2, kb2 = jax.random.split(key, 5)
    x = jax.random.normal(kx, (B, N, C), dtype=jnp.float32)
    w1 = 0.02 * jax.random.normal(k1, (H, C), dtype=jnp.float32)
    b1 = 0.01 * jax.random.normal(kb1, (H,), dtype=jnp.float32)
    w2 = 0.02 * jax.random.normal(k2, (C, H), dtype=jnp.float32)
    b2 = 0.01 * jax.random.normal(kb2, (C,), dtype=jnp.float32)

    # block_rows=16 -> two row tiles even at this toy size (exercises the grid).
    out = mlp_forward(x, w1, b1, w2, b2, block_rows=16)
    jax.block_until_ready(out)

    ref = reference_forward(x, w1, b1, w2, b2)
    # bf16 matmul operands with f32 accumulation -> small rounding vs f32 ref.
    assert out.shape == ref.shape, "shape mismatch"
    assert jnp.allclose(out, ref, atol=5e-3, rtol=5e-2), "output mismatch"

    print("KERNEL_OK")
</pallas_src>

<mosaic_0001>
module attributes {stable_mosaic.version = 11 : i64} {
  func.func @mlp_kernel(%arg0: i32, %arg1: memref<16x32xbf16, #tpu.memory_space<vmem>>, %arg2: memref<32x128xbf16, #tpu.memory_space<vmem>>, %arg3: memref<1x128xf32, #tpu.memory_space<vmem>>, %arg4: memref<128x32xbf16, #tpu.memory_space<vmem>>, %arg5: memref<1x32xf32, #tpu.memory_space<vmem>>, %arg6: memref<16x32xf32, #tpu.memory_space<vmem>>) attributes {dimension_semantics = [#tpu.dimension_semantics<parallel>], iteration_bounds = array<i64: 2>, scalar_prefetch = 0 : i64, scratch_operands = 0 : i64, tpu.core_type = #tpu.core_type<tc>, window_params = [{transform_indices = @transform_0, window_bounds = array<i64: 16, 32>}, {pipeline_mode = #tpu.pipeline_mode<synchronous>, transform_indices = @transform_1, window_bounds = array<i64: 32, 128>}, {pipeline_mode = #tpu.pipeline_mode<synchronous>, transform_indices = @transform_2, window_bounds = array<i64: 1, 128>}, {pipeline_mode = #tpu.pipeline_mode<synchronous>, transform_indices = @transform_3, window_bounds = array<i64: 128, 32>}, {pipeline_mode = #tpu.pipeline_mode<synchronous>, transform_indices = @transform_4, window_bounds = array<i64: 1, 32>}, {transform_indices = @transform_5, window_bounds = array<i64: 16, 32>}]} {
    %c0 = arith.constant 0 : index
    %c0_0 = arith.constant 0 : index
    %0 = vector.load %arg1[%c0, %c0_0] : memref<16x32xbf16, #tpu.memory_space<vmem>>, vector<16x32xbf16>
    %c0_1 = arith.constant 0 : index
    %c0_2 = arith.constant 0 : index
    %1 = vector.load %arg2[%c0_1, %c0_2] : memref<32x128xbf16, #tpu.memory_space<vmem>>, vector<32x128xbf16>
    %cst = arith.constant dense<0.000000e+00> : vector<16x128xf32>
    %2 = tpu.matmul %0, %1, %cst {dimension_numbers = #tpu.dot_dimension_numbers<[1], [0], [0], [1], [0, 0, 1, 1], [], []>} : vector<16x32xbf16>, vector<32x128xbf16>, vector<16x128xf32> -> vector<16x128xf32>
    %c0_3 = arith.constant 0 : index
    %c0_4 = arith.constant 0 : index
    %3 = vector.load %arg3[%c0_3, %c0_4] : memref<1x128xf32, #tpu.memory_space<vmem>>, vector<1x128xf32>
    %4 = vector.broadcast %3 : vector<1x128xf32> to vector<16x128xf32>
    %5 = arith.addf %2, %4 : vector<16x128xf32>
    %cst_5 = arith.constant 5.000000e-01 : f32
    %6 = vector.broadcast %cst_5 : f32 to vector<16x128xf32>
    %7 = arith.mulf %6, %5 : vector<16x128xf32>
    %cst_6 = arith.constant 0.707106769 : f32
    %8 = vector.broadcast %cst_6 : f32 to vector<16x128xf32>
    %9 = arith.mulf %5, %8 : vector<16x128xf32>
    %10 = math.erf %9 : vector<16x128xf32>
    %cst_7 = arith.constant 1.000000e+00 : f32
    %11 = vector.broadcast %cst_7 : f32 to vector<16x128xf32>
    %12 = arith.addf %11, %10 : vector<16x128xf32>
    %13 = arith.mulf %7, %12 : vector<16x128xf32>
    %14 = arith.truncf %13 : vector<16x128xf32> to vector<16x128xbf16>
    %c0_8 = arith.constant 0 : index
    %c0_9 = arith.constant 0 : index
    %15 = vector.load %arg4[%c0_8, %c0_9] : memref<128x32xbf16, #tpu.memory_space<vmem>>, vector<128x32xbf16>
    %cst_10 = arith.constant dense<0.000000e+00> : vector<16x32xf32>
    %16 = tpu.matmul %14, %15, %cst_10 {dimension_numbers = #tpu.dot_dimension_numbers<[1], [0], [0], [1], [0, 0, 1, 1], [], []>} : vector<16x128xbf16>, vector<128x32xbf16>, vector<16x32xf32> -> vector<16x32xf32>
    %c0_11 = arith.constant 0 : index
    %c0_12 = arith.constant 0 : index
    %17 = vector.load %arg5[%c0_11, %c0_12] : memref<1x32xf32, #tpu.memory_space<vmem>>, vector<1x32xf32>
    %18 = vector.broadcast %17 : vector<1x32xf32> to vector<16x32xf32>
    %19 = arith.addf %16, %18 : vector<16x32xf32>
    %c0_13 = arith.constant 0 : index
    %c0_14 = arith.constant 0 : index
    %20 = vector.load %arg6[%c0_13, %c0_14] : memref<16x32xf32, #tpu.memory_space<vmem>>, vector<16x32xf32>
    tpu.vector_store %arg6[%c0_13, %c0_14], %19 {strides = array<i32>} : memref<16x32xf32, #tpu.memory_space<vmem>>, vector<16x32xf32>,
    return
  }
  func.func @transform_0(%arg0: i32) -> (i32, i32) {
    %c0_i32 = arith.constant 0 : i32
    %c0_i32_0 = arith.constant 0 : i32
    return %arg0, %c0_i32 : i32, i32
  }
  func.func @transform_1(%arg0: i32) -> (i32, i32) {
    %c0_i32 = arith.constant 0 : i32
    %c0_i32_0 = arith.constant 0 : i32
    %c0_i32_1 = arith.constant 0 : i32
    return %c0_i32, %c0_i32_0 : i32, i32
  }
  func.func @transform_2(%arg0: i32) -> (i32, i32) {
    %c0_i32 = arith.constant 0 : i32
    %c0_i32_0 = arith.constant 0 : i32
    %c0_i32_1 = arith.constant 0 : i32
    return %c0_i32, %c0_i32_0 : i32, i32
  }
  func.func @transform_3(%arg0: i32) -> (i32, i32) {
    %c0_i32 = arith.constant 0 : i32
    %c0_i32_0 = arith.constant 0 : i32
    %c0_i32_1 = arith.constant 0 : i32
    return %c0_i32, %c0_i32_0 : i32, i32
  }
  func.func @transform_4(%arg0: i32) -> (i32, i32) {
    %c0_i32 = arith.constant 0 : i32
    %c0_i32_0 = arith.constant 0 : i32
    %c0_i32_1 = arith.constant 0 : i32
    return %c0_i32, %c0_i32_0 : i32, i32
  }
  func.func @transform_5(%arg0: i32) -> (i32, i32) {
    %c0_i32 = arith.constant 0 : i32
    %c0_i32_0 = arith.constant 0 : i32
    return %arg0, %c0_i32 : i32, i32
  }
}

</mosaic_0001>

<llo_original>
// kernel: tpu_custom_call.1
$region0: #{tpu_custom_call.1}
  #allocation0 [shape = 'u32[]', space=smem, size = 0x4, offset = 0x4, fixed_abs, tag = 'smem constant byte address 0x4 - core index']
  #allocation1 [shape = 'u32[144,128]{1,0:T(1,128)}', space=vmem, size = 0x12000, scoped, tag = 'internal scratch']
  %s0 = inlined_call_operand.vmem [shape: bf16[32,32], index: 0, kind: input, shape index: {}]
  %s1 = inlined_call_operand.vmem [shape: bf16[32,128], index: 1, kind: input, shape index: {}]
  %s2 = inlined_call_operand.vmem [shape: f32[1,128], index: 2, kind: input, shape index: {}]
  %s3 = inlined_call_operand.vmem [shape: bf16[128,32], index: 3, kind: input, shape index: {}]
  %s4 = inlined_call_operand.vmem [shape: f32[1,32], index: 4, kind: input, shape index: {}]
  %s5 = inlined_call_operand.hbm [shape: f32[32,32], index: 5, kind: output, shape index: {}]
  %s6 = sld [smem:[#allocation0]]
  $region53: #{tpu_custom_call.1} parent=0
    _
  %s8 = ssub.s32 1, %s6
  %s9 = scalar_select 0, %s8, %s6
  $region1: #{tpu_custom_call.1} parent=0
    #allocation2 [shape = 'u8[16384]{0}', space=vmem, size = 0x4000, scoped, tag = 'output window, operand 0']
    #allocation3 [shape = 's32[2]{0}', space=sflag, size = 0x8, scoped, tag = 'scoped memory for tpu_custom_call.1']
    %10 = vsyncpa [#allocation3], 0
    %s11 = scalar_lea.sflag [#allocation3], 1
    %12 = vsyncpa %s11, 0
    loop: start=0, step=1, limit=4
    $region2: #{tpu_custom_call.1} parent=1 // loop_pre_header
      _
    $region3: #{tpu_custom_call.1} parent=1 // loop_header
      %s14 = sphi 0, %s18
      %p15 = scmp.ge.s32.totalorder %s14, 4
      %s24 = sphi 0, %s26
      %s27 = sphi 0, %s24
      %s28 = sphi 0, %s27
      %s44 = sphi 0, %s28
      %s48 = sphi 0, %s48
      %s50 = sphi 0, %s48
      %s51 = sphi 0, %s50
      %s65 = sphi 0, %s51
      %s69 = sphi 0, %s69
      %s71 = sphi 0, %s69
      %s72 = sphi 0, %s71
      %s86 = sphi 0, %s72
      %s90 = sphi 0, %s90
      %s92 = sphi 0, %s90
      %s93 = sphi 0, %s92
      %s107 = sphi 0, %s93
      %s111 = sphi 0, %s111
      %s113 = sphi 0, %s111
      %s114 = sphi 0, %s113
      %s128 = sphi 0, %s114
      %s134 = sphi 0, %s136
      %s137 = sphi 0, %s134
      %s138 = sphi 0, %s137
      %s154 = sphi 0, %s138
    $region4: #{tpu_custom_call.1} parent=1 // loop_header_branch
      %17 = sbr.rel (%p15) target = $region8
    $region5: #{tpu_custom_call.1} parent=1 // loop_body
      %s19 = ssub.s32 %s14, 1
      %s20 = ssub.s32 %s14, 2
      %s21 = sadd.s32 %s14, 1
      %s22 = ssub.s32 %s14, %s21
      %p23 = scmp.eq.s32.totalorder %s22, 0
      %s25 = sadd.s32 %s24, 1
      %s26 = scalar_select %p23, %s24, %s25
      %p29 = pneg %p23
      %p30 = scmp.eq.s32.totalorder %s14, 1
      %p31 = por %p29, %p30
      %p32 = scmp.ne.s32.totalorder %s24, %s27
      %p33 = scmp.eq.s32.totalorder %s14, 0
      %p34 = por %p32, %p33
      %p35 = scmp.ne.s32.totalorder %s24, %s27
      %p36 = scmp.eq.s32.totalorder %s19, 1
      %p37 = por %p35, %p36
      %p38 = scmp.ne.s32.totalorder %s27, %s28
      %p39 = scmp.eq.s32.totalorder %s19, 0
      %p40 = por %p38, %p39
      %p41 = scmp.ne.s32.totalorder %s27, %s28
      %p42 = scmp.eq.s32.totalorder %s20, 1
      %p43 = por %p41, %p42
      %p45 = scmp.ne.s32.totalorder %s28, %s44
      %p46 = scmp.eq.s32.totalorder %s20, 0
      %p47 = por %p45, %p46
      %s49 = sadd.s32 %s48, 1
      %p52 = scmp.eq.s32.totalorder %s14, 1
      %p53 = scmp.ne.s32.totalorder %s48, %s50
      %p54 = scmp.eq.s32.totalorder %s14, 0
      %p55 = por %p53, %p54
      %p56 = scmp.ne.s32.totalorder %s48, %s50
      %p57 = scmp.eq.s32.totalorder %s19, 1
      %p58 = por %p56, %p57
      %p59 = scmp.ne.s32.totalorder %s50, %s51
      %p60 = scmp.eq.s32.totalorder %s19, 0
      %p61 = por %p59, %p60
      %p62 = scmp.ne.s32.totalorder %s50, %s51
      %p63 = scmp.eq.s32.totalorder %s20, 1
      %p64 = por %p62, %p63
      %p66 = scmp.ne.s32.totalorder %s51, %s65
      %p67 = scmp.eq.s32.totalorder %s20, 0
      %p68 = por %p66, %p67
      %s70 = sadd.s32 %s69, 1
      %p73 = scmp.eq.s32.totalorder %s14, 1
      %p74 = scmp.ne.s32.totalorder %s69, %s71
      %p75 = scmp.eq.s32.totalorder %s14, 0
      %p76 = por %p74, %p75
      %p77 = scmp.ne.s32.totalorder %s69, %s71
      %p78 = scmp.eq.s32.totalorder %s19, 1
      %p79 = por %p77, %p78
      %p80 = scmp.ne.s32.totalorder %s71, %s72
      %p81 = scmp.eq.s32.totalorder %s19, 0
      %p82 = por %p80, %p81
      %p83 = scmp.ne.s32.totalorder %s71, %s72
      %p84 = scmp.eq.s32.totalorder %s20, 1
      %p85 = por %p83, %p84
      %p87 = scmp.ne.s32.totalorder %s72, %s86
      %p88 = scmp.eq.s32.totalorder %s20, 0
      %p89 = por %p87, %p88
      %s91 = sadd.s32 %s90, 1
      %p94 = scmp.eq.s32.totalorder %s14, 1
      %p95 = scmp.ne.s32.totalorder %s90, %s92
      %p96 = scmp.eq.s32.totalorder %s14, 0
      %p97 = por %p95, %p96
      %p98 = scmp.ne.s32.totalorder %s90, %s92
      %p99 = scmp.eq.s32.totalorder %s19, 1
      %p100 = por %p98, %p99
      %p101 = scmp.ne.s32.totalorder %s92, %s93
      %p102 = scmp.eq.s32.totalorder %s19, 0
      %p103 = por %p101, %p102
      %p104 = scmp.ne.s32.totalorder %s92, %s93
      %p105 = scmp.eq.s32.totalorder %s20, 1
      %p106 = por %p104, %p105
      %p108 = scmp.ne.s32.totalorder %s93, %s107
      %p109 = scmp.eq.s32.totalorder %s20, 0
      %p110 = por %p108, %p109
      %s112 = sadd.s32 %s111, 1
      %p115 = scmp.eq.s32.totalorder %s14, 1
      %p116 = scmp.ne.s32.totalorder %s111, %s113
      %p117 = scmp.eq.s32.totalorder %s14, 0
      %p118 = por %p116, %p117
      %p119 = scmp.ne.s32.totalorder %s111, %s113
      %p120 = scmp.eq.s32.totalorder %s19, 1
      %p121 = por %p119, %p120
      %p122 = scmp.ne.s32.totalorder %s113, %s114
      %p123 = scmp.eq.s32.totalorder %s19, 0
      %p124 = por %p122, %p123
      %p125 = scmp.ne.s32.totalorder %s113, %s114
      %p126 = scmp.eq.s32.totalorder %s20, 1
      %p127 = por %p125, %p126
      %p129 = scmp.ne.s32.totalorder %s114, %s128
      %p130 = scmp.eq.s32.totalorder %s20, 0
      %p131 = por %p129, %p130
      %s132 = ssub.s32 %s14, %s21
      %p133 = scmp.eq.s32.totalorder %s132, 0
      %s135 = sadd.s32 %s134, 1
      %s136 = scalar_select %p133, %s134, %s135
      %p139 = pneg %p133
      %p140 = scmp.eq.s32.totalorder %s14, 1
      %p141 = por %p139, %p140
      %p142 = scmp.ne.s32.totalorder %s134, %s137
      %p143 = scmp.eq.s32.totalorder %s14, 0
      %p144 = por %p142, %p143
      %p145 = scmp.ne.s32.totalorder %s134, %s137
      %p146 = scmp.eq.s32.totalorder %s19, 1
      %p147 = por %p145, %p146
      %p148 = scmp.ne.s32.totalorder %s137, %s138
      %p149 = scmp.eq.s32.totalorder %s19, 0
      %p150 = por %p148, %p149
      %p151 = scmp.ne.s32.totalorder %s137, %s138
      %p152 = scmp.eq.s32.totalorder %s20, 1
      %p153 = por %p151, %p152
      %p155 = scmp.ne.s32.totalorder %s138, %s154
      %p156 = scmp.eq.s32.totalorder %s20, 0
      %p157 = por %p155, %p156
      %p158 = scmp.le.s32.totalorder 1, %s14
      %p159 = scmp.lt.s32.totalorder %s14, 3
      %p160 = pnand %p158, %p159
      %p161 = pneg %p160
      // Predicated region
      $region9: #{tpu_custom_call.1} parent=5 // pred_check
        _
      $region10: #{tpu_custom_call.1} parent=5 // pred_check_branch
        %163 = sbr.rel (%p160) target = $region12
      $region11: #{tpu_custom_call.1} parent=5 // pred_region
        %s164 = ssub.s32 %s14, 1
        // Predicated region
        $region13: #{tpu_custom_call.1} parent=11 // pred_check
          %p165 = pneg %p61
        $region14: #{tpu_custom_call.1} parent=11 // pred_check_branch
          %167 = sbr.rel (%p165) target = $region16
        $region15: #{tpu_custom_call.1} parent=11 // pred_region
          _
        $region16: #{tpu_custom_call.1} parent=11 // pred_fallthru
          _
        // Predicated region
        $region17: #{tpu_custom_call.1} parent=11 // pred_check
          %p168 = pneg %p82
        $region18: #{tpu_custom_call.1} parent=11 // pred_check_branch
          %170 = sbr.rel (%p168) target = $region20
        $region19: #{tpu_custom_call.1} parent=11 // pred_region
          _
        $region20: #{tpu_custom_call.1} parent=11 // pred_fallthru
          _
        // Predicated region
        $region21: #{tpu_custom_call.1} parent=11 // pred_check
          %p171 = pneg %p103
        $region22: #{tpu_custom_call.1} parent=11 // pred_check_branch
          %173 = sbr.rel (%p171) target = $region24
        $region23: #{tpu_custom_call.1} parent=11 // pred_region
          _
        $region24: #{tpu_custom_call.1} parent=11 // pred_fallthru
          _
        // Predicated region
        $region25: #{tpu_custom_call.1} parent=11 // pred_check
          %p174 = pneg %p124
        $region26: #{tpu_custom_call.1} parent=11 // pred_check_branch
          %176 = sbr.rel (%p174) target = $region28
        $region27: #{tpu_custom_call.1} parent=11 // pred_region
          _
        $region28: #{tpu_custom_call.1} parent=11 // pred_fallthru
          _
      $region12: #{tpu_custom_call.1} parent=5 // pred_fallthru
        _
      %p177 = scmp.lt.s32.totalorder %s14, 2
      // Predicated region
      $region29: #{tpu_custom_call.1} parent=5 // pred_check
        %p178 = pneg %p177
      $region30: #{tpu_custom_call.1} parent=5 // pred_check_branch
        %180 = sbr.rel (%p178) target = $region32
      $region31: #{tpu_custom_call.1} parent=5 // pred_region
        // Predicated region
        $region33: #{tpu_custom_call.1} parent=31 // pred_check
          %p181 = pneg %p34
        $region34: #{tpu_custom_call.1} parent=31 // pred_check_branch
          %183 = sbr.rel (%p181) target = $region36
        $region35: #{tpu_custom_call.1} parent=31 // pred_region
          %s184 = smul.u32 2, %s14
          %p185 = scmp.lt.s32.totalorder %s184, 3
          %s186 = scalar_select %p185, %s184, 3
          %s187 = smul.addr %s186, 4
          %s188 = scalar_lea.vmem %s0, %s187
          %s189 = smul.u32 2, %s14
        $region36: #{tpu_custom_call.1} parent=31 // pred_fallthru
          _
      $region32: #{tpu_custom_call.1} parent=5 // pred_fallthru
        _
      %p190 = scmp.le.s32.totalorder 1, %s14
      %p191 = scmp.lt.s32.totalorder %s14, 3
      %p192 = pnand %p190, %p191
      %p193 = pneg %p192
      // Predicated region
      $region37: #{tpu_custom_call.1} parent=5 // pred_check
        _
      $region38: #{tpu_custom_call.1} parent=5 // pred_check_branch
        %195 = sbr.rel (%p192) target = $region40
      $region39: #{tpu_custom_call.1} parent=5 // pred_region
        %s196 = ssub.s32 %s14, 1
        %s197 = smul.u32 2, %s19
        %p198 = scmp.lt.s32.totalorder %s197, 3
        %s199 = scalar_select %p198, %s197, 3
        %s200 = smul.addr %s199, 4
        %s201 = scalar_lea.vmem %s0, %s200
        %p202 = pneg %p40
        %p203 = pneg %p37
        %p204 = pneg %p61
        %p205 = pneg %p58
        %p206 = pneg %p82
        %p207 = pneg %p79
        %p208 = pneg %p103
        %p209 = pneg %p100
        %p210 = pneg %p124
        %p211 = pneg %p121
        %p212 = pneg %p150
        %p213 = pneg %p147
        %s214 = sand.u32 %s137, 1
        %s215 = scalar_lea.sflag [#allocation3], %s214
        %s216 = sand.u32 %s137, 1
        %s217 = smul.addr %s216, 16
        %s218 = scalar_lea.vmem [#allocation2], %s217
        %s219 = smul.u32 2, %s19
        %p220 = scmp.lt.s32.totalorder %s219, 3
        %s221 = scalar_select %p220, %s219, 3
        %s222 = smul.addr %s221, 4
        %s223 = scalar_lea.vmem %s0, %s222
        %s224 = smul.u32 2, %s19
        %s225 = smul.u32 2, %s19
        %v227 = vld [vmem:[%s223] sm:$0xf]
        %v228 = vld [vmem:[%s223 + $0x4] sm:$0xf]
        %v229 = vld [vmem:[%s1] sm:$0xf]
        %v230 = vld [vmem:[%s1 + $0x4] sm:$0xf]
        %v231 = vld [vmem:[%s1 + $0x8] sm:$0xf]
        %v232 = vld [vmem:[%s1 + $0xc] sm:$0xf]
        %v233 = vld [vmem:[%s2] sm:$0x1]
        %v235 = vlaneseq
        %v236 = vshrl.u32 %v235, 7
        %v237 = vsub.s32 0, %v236
        %v238 = vrot.slane %v233, %v237
        %v242 = vunpack.c.l.b16 %v227
        %v243 = vunpack.c.l.b16 %v228
        %v244 = vpack.c.b16 %v243, %v242
        %v249 = vunpack.c.l.b16 %v229
        %v250 = vunpack.c.l.b16 %v230
        %v251 = vunpack.c.l.b16 %v231
        %v252 = vunpack.c.l.b16 %v232
        %v253 = vpack.c.b16 %v250, %v249
        %v254 = vpack.c.b16 %v252, %v251
        %vm257 = vcmask 261120
        %v259 = vsel %vm257, %v244, 0
        %261 = vmatprep.subr.bf16.mxu0 0
        %262 = vmatpush1.bf16.msra.mxu0 %v253
        %263 = vmatprep.subr.bf16.mxu0 0
        %264 = vmatpush1.bf16.msra.mxu0 %v254
        %265 = vmatprep.subr.bf16.mxu0 0
        %266 = vmatpush1.bf16.msra.mxu0 0
        %267 = vmatprep.subr.bf16.mxu0 0
        %268 = vmatpush1.bf16.msra.mxu0 0
        %269 = vmatprep.subr.bf16.mxu0 0
        %270 = vmatpush1.bf16.msra.mxu0 0
        %271 = vmatprep.subr.bf16.mxu0 0
        %272 = vmatpush1.bf16.msra.mxu0 0
        %273 = vmatprep.subr.bf16.mxu0 0
        %274 = vmatpush1.bf16.msra.mxu0 0
        %275 = vmatprep.subr.bf16.mxu0 0
        %276 = vmatpush1.bf16.msra.mxu0 0
        %277 = vmatprep.subr.bf16.mxu0 0
        %278 = vmatpush1.bf16.msra.mxu0 0
        %279 = vmatprep.subr.bf16.mxu0 0
        %280 = vmatpush1.bf16.msra.mxu0 0
        %281 = vmatprep.subr.bf16.mxu0 0
        %282 = vmatpush1.bf16.msra.mxu0 0
        %283 = vmatprep.subr.bf16.mxu0 0
        %284 = vmatpush1.bf16.msra.mxu0 0
        %285 = vmatprep.subr.bf16.mxu0 0
        %286 = vmatpush1.bf16.msra.mxu0 0
        %287 = vmatprep.subr.bf16.mxu0 0
        %288 = vmatpush1.bf16.msra.mxu0 0
        %289 = vmatprep.subr.bf16.mxu0 0
        %290 = vmatpush1.bf16.msra.mxu0 0
        %291 = vmatprep.subr.bf16.mxu0 0
        %292 = vmatpush1.bf16.msra.mxu0 0
        %293 = vmatprep.mubr.bf16.mxu0 0
        %294 = vmatmul.mubr.bf16.gmra.mrb[0].mxu0 %v259
        %v295 = vpop.f32.mrb[0].mxu0
        %v296 = vadd.f32 %v238, %v295
        %v297 = vpop.f32.mrb[0].mxu0
        %v298 = vpop.f32.mrb[0].mxu0
        %v299 = vadd.f32 %v238, %v298
        %v300 = vpop.f32.mrb[0].mxu0
        %301 = vdwg.mxu0
        %v302 = vmul.f32 %v296, 0.5
        %v303 = vmul.f32 %v299, 0.5
        %v304 = vmul.f32 %v296, 0.70710677
        %v305 = vmul.f32 %v299, 0.70710677
        %v306 = verf.f32.pop %v304
        %v307 = verf.f32.pop %v305
        %v308 = vadd.f32 %v306, 1.0
        %v309 = vadd.f32 %v307, 1.0
        %v310 = vmul.f32 %v302, %v308
        %v311 = vmul.f32 %v303, %v309
        %v312 = vpack.c.bf16 %v311, %v310
        %v313 = vld [vmem:[%s3] sm:$0xf]
        %v314 = vld [vmem:[%s3 + $0x4] sm:$0xf]
        %v315 = vld [vmem:[%s3 + $0x8] sm:$0xf]
        %v316 = vld [vmem:[%s3 + $0xc] sm:$0xf]
        %v317 = vld [vmem:[%s3 + $0x10] sm:$0xf]
        %v318 = vld [vmem:[%s3 + $0x14] sm:$0xf]
        %v319 = vld [vmem:[%s3 + $0x18] sm:$0xf]
        %v320 = vld [vmem:[%s3 + $0x1c] sm:$0xf]
        %v321 = vld [vmem:[%s3 + $0x20] sm:$0xf]
        %v322 = vld [vmem:[%s3 + $0x24] sm:$0xf]
        %v323 = vld [vmem:[%s3 + $0x28] sm:$0xf]
        %v324 = vld [vmem:[%s3 + $0x2c] sm:$0xf]
        %v325 = vld [vmem:[%s3 + $0x30] sm:$0xf]
        %v326 = vld [vmem:[%s3 + $0x34] sm:$0xf]
        %v327 = vld [vmem:[%s3 + $0x38] sm:$0xf]
        %v328 = vld [vmem:[%s3 + $0x3c] sm:$0xf]
        %v329 = vld [vmem:[%s4] sm:$0x1]
        %v331 = vlaneseq
        %v332 = vshrl.u32 %v331, 7
        %v333 = vsub.s32 0, %v332
        %v334 = vrot.slane %v329, %v333
        %v352 = vunpack.c.l.b16 %v313
        %v353 = vunpack.c.l.b16 %v314
        %v354 = vunpack.c.l.b16 %v315
        %v355 = vunpack.c.l.b16 %v316
        %v356 = vunpack.c.l.b16 %v317
        %v357 = vunpack.c.l.b16 %v318
        %v358 = vunpack.c.l.b16 %v319
        %v359 = vunpack.c.l.b16 %v320
        %v360 = vunpack.c.l.b16 %v321
        %v361 = vunpack.c.l.b16 %v322
        %v362 = vunpack.c.l.b16 %v323
        %v363 = vunpack.c.l.b16 %v324
        %v364 = vunpack.c.l.b16 %v325
        %v365 = vunpack.c.l.b16 %v326
        %v366 = vunpack.c.l.b16 %v327
        %v367 = vunpack.c.l.b16 %v328
        %v368 = vpack.c.b16 %v353, %v352
        %v369 = vpack.c.b16 %v355, %v354
        %v370 = vpack.c.b16 %v357, %v356
        %v371 = vpack.c.b16 %v359, %v358
        %v372 = vpack.c.b16 %v361, %v360
        %v373 = vpack.c.b16 %v363, %v362
        %v374 = vpack.c.b16 %v365, %v364
        %v375 = vpack.c.b16 %v367, %v366
        %384 = vmatprep.subr.bf16.mxu0 0
        %385 = vmatpush1.bf16.msra.mxu0 %v368
        %386 = vmatprep.subr.bf16.mxu0 0
        %387 = vmatpush1.bf16.msra.mxu0 %v369
        %388 = vmatprep.subr.bf16.mxu0 0
        %389 = vmatpush1.bf16.msra.mxu0 %v370
        %390 = vmatprep.subr.bf16.mxu0 0
        %391 = vmatpush1.bf16.msra.mxu0 %v371
        %392 = vmatprep.subr.bf16.mxu0 0
        %393 = vmatpush1.bf16.msra.mxu0 %v372
        %394 = vmatprep.subr.bf16.mxu0 0
        %395 = vmatpush1.bf16.msra.mxu0 %v373
        %396 = vmatprep.subr.bf16.mxu0 0
        %397 = vmatpush1.bf16.msra.mxu0 %v374
        %398 = vmatprep.subr.bf16.mxu0 0
        %399 = vmatpush1.bf16.msra.mxu0 %v375
        %400 = vmatprep.subr.bf16.mxu0 0
        %401 = vmatpush1.bf16.msra.mxu0 0
        %402 = vmatprep.subr.bf16.mxu0 0
        %403 = vmatpush1.bf16.msra.mxu0 0
        %404 = vmatprep.subr.bf16.mxu0 0
        %405 = vmatpush1.bf16.msra.mxu0 0
        %406 = vmatprep.subr.bf16.mxu0 0
        %407 = vmatpush1.bf16.msra.mxu0 0
        %408 = vmatprep.subr.bf16.mxu0 0
        %409 = vmatpush1.bf16.msra.mxu0 0
        %410 = vmatprep.subr.bf16.mxu0 0
        %411 = vmatpush1.bf16.msra.mxu0 0
        %412 = vmatprep.subr.bf16.mxu0 0
        %413 = vmatpush1.bf16.msra.mxu0 0
        %414 = vmatprep.subr.bf16.mxu0 0
        %415 = vmatpush1.bf16.msra.mxu0 0
        %416 = vmatprep.mubr.bf16.mxu0 0
        %417 = vmatmul.mubr.bf16.gmra.mrb[0].mxu0 %v312
        %v418 = vpop.f32.mrb[0].mxu0
        %v419 = vadd.f32 %v334, %v418
        %v420 = vpop.f32.mrb[0].mxu0
        %v421 = vpop.f32.mrb[0].mxu0
        %v422 = vadd.f32 %v334, %v421
        %v423 = vpop.f32.mrb[0].mxu0
        %424 = vdwg.mxu0
        %425 = vst.msk [vmem:[%s218] sm:$0xff] %vm257, %v419
        %426 = vst.msk [vmem:[%s218 + $0x8] sm:$0xff] %vm257, %v422
        %s427 = sand.u32 %s137, 1
        %s428 = scalar_lea.sflag [#allocation3], %s427
        %s429 = sand.u32 %s137, 1
        %s430 = smul.addr %s429, 16
        %s431 = scalar_lea.vmem [#allocation2], %s430
        // Predicated region
        $region41: #{tpu_custom_call.1} parent=39 // pred_check
          %p432 = pneg %p147
        $region42: #{tpu_custom_call.1} parent=39 // pred_check_branch
          %434 = sbr.rel (%p432) target = $region44
        $region43: #{tpu_custom_call.1} parent=39 // pred_region
          %s435 = smul.u32 2, %s19
          %s437 = ssub.s32 256, 256
          %438 = vsyncadd %s428, %s437
          %s439 = smul.addr %s435, 128
          %s440 = scalar_lea.hbm %s5, %s439
          %s441 = sshll.u32 %s431, 4
          %s442 = int_to_ptr.vmem [resolvable:$true] %s441
          %447 = dma.vmem_to_hbm [thread:$0]  %s442, 256, %s440, %s428, 128, 128, 8
        $region44: #{tpu_custom_call.1} parent=39 // pred_fallthru
          _
      $region40: #{tpu_custom_call.1} parent=5 // pred_fallthru
        _
      %p448 = scmp.le.s32.totalorder 2, %s14
      // Predicated region
      $region45: #{tpu_custom_call.1} parent=5 // pred_check
        %p449 = pneg %p448
      $region46: #{tpu_custom_call.1} parent=5 // pred_check_branch
        %451 = sbr.rel (%p449) target = $region48
      $region47: #{tpu_custom_call.1} parent=5 // pred_region
        %s452 = ssub.s32 %s14, 2
        // Predicated region
        $region49: #{tpu_custom_call.1} parent=47 // pred_check
          %p453 = pneg %p153
        $region50: #{tpu_custom_call.1} parent=47 // pred_check_branch
          %455 = sbr.rel (%p453) target = $region52
        $region51: #{tpu_custom_call.1} parent=47 // pred_region
          %s456 = sand.u32 %s138, 1
          %s457 = scalar_lea.sflag [#allocation3], %s456
          %s458 = sand.u32 %s138, 1
          %s459 = smul.addr %s458, 16
          %s460 = scalar_lea.vmem [#allocation2], %s459
          %461 = dma.done %s457, 256
        $region52: #{tpu_custom_call.1} parent=47 // pred_fallthru
          _
      $region48: #{tpu_custom_call.1} parent=5 // pred_fallthru
        _
    $region6: #{tpu_custom_call.1} parent=1 // loop_footer
      %s18 = sadd.s32 1, %s14
    $region7: #{tpu_custom_call.1} parent=1 // loop_footer_branch
      %13 = sbr.rel target = $region3
    $region8: #{tpu_custom_call.1} parent=1 // loop_exit
      _
    %462 = vsyncpa [#allocation3], 1
    %s463 = scalar_lea.sflag [#allocation3], 1
    %464 = vsyncpa %s463, 1

</llo_original>
